<compile_context>
chip_gen: v7x
topology: tpu7x:2x2x1
jax: 0.10.0
libtpu: 0.0.40
codegen_flags: <defaults>
</compile_context>

<pallas_src>
import jax
import jax.numpy as jnp
from jax.experimental import pallas as pl
from jax.experimental.pallas import tpu as pltpu


# --------------------------------------------------------------------------- #
# Shared in-kernel math
# --------------------------------------------------------------------------- #
def _fast_sigmoid(z):
    # sigmoid(z) == 0.5 * tanh(0.5 * z) + 0.5 : one EUP push instead of exp+recip.
    return 0.5 * jnp.tanh(0.5 * z) + 0.5


def _lstm_math(x, h, c, w_x, w_h):
    """Fused-gate LSTM cell math. x:(B,I) h,c:(B,H) f32; w_x:(I,4H) w_h:(H,4H)."""
    mxu_dtype = w_h.dtype
    # Two accumulating MXU matmuls == one matmul over concat([h, x]); f32 accum.
    z = (jnp.dot(h.astype(mxu_dtype), w_h, preferred_element_type=jnp.float32) +
         jnp.dot(x.astype(mxu_dtype), w_x, preferred_element_type=jnp.float32))
    hidden = w_h.shape[0]
    f = _fast_sigmoid(z[:, 0 * hidden:1 * hidden])
    i = _fast_sigmoid(z[:, 1 * hidden:2 * hidden])
    g = jnp.tanh(z[:, 2 * hidden:3 * hidden])
    o = _fast_sigmoid(z[:, 3 * hidden:4 * hidden])
    c_new = c * f + i * g
    h_new = jnp.tanh(c_new) * o
    return h_new, c_new


# --------------------------------------------------------------------------- #
# Single-step cell kernel (mirrors PeepholedLSTMCell.forward)
# --------------------------------------------------------------------------- #
def lstm_cell_kernel(x_ref, h_ref, c_ref, wx_ref, wh_ref, h_out_ref, c_out_ref):
    h_new, c_new = _lstm_math(
        x_ref[...],
        h_ref[...].astype(jnp.float32),
        c_ref[...].astype(jnp.float32),
        wx_ref[...], wh_ref[...])
    h_out_ref[...] = h_new.astype(h_out_ref.dtype)
    c_out_ref[...] = c_new.astype(c_out_ref.dtype)


# --------------------------------------------------------------------------- #
# Whole-sequence kernel: time loop inside one pallas_call, weights VMEM-resident
# --------------------------------------------------------------------------- #
def lstm_seq_kernel(x_ref, h0_ref, c0_ref, wx_ref, wh_ref,
                    h_seq_ref, c_final_ref, h_sc, c_sc):
    t = pl.program_id(0)

    @pl.when(t == 0)
    def _():
        h_sc[...] = h0_ref[...].astype(jnp.float32)
        c_sc[...] = c0_ref[...].astype(jnp.float32)

    h_new, c_new = _lstm_math(x_ref[0], h_sc[...], c_sc[...],
                              wx_ref[...], wh_ref[...])
    h_sc[...] = h_new
    c_sc[...] = c_new
    h_seq_ref[0] = h_new.astype(h_seq_ref.dtype)
    c_final_ref[...] = c_new.astype(c_final_ref.dtype)


# --------------------------------------------------------------------------- #
# Wrappers
# --------------------------------------------------------------------------- #
def fuse_lstm_params(params, mxu_dtype=jnp.bfloat16):
    """One-time weight prep (done OUTSIDE the recurrent step).

    params: dict with 'forget_gate_w', 'input_gate_w', 'candidate_w',
            'output_gate_w', each of shape (H, H+I) (F.linear over [prev_h, x]).
    Returns (w_h, w_x): (H, 4H) and (I, 4H), transposed, fused, cast to mxu_dtype.
    """
    hidden = params["forget_gate_w"].shape[0]
    w = jnp.concatenate(
        [params["forget_gate_w"], params["input_gate_w"],
         params["candidate_w"], params["output_gate_w"]], axis=0)   # (4H, H+I)
    w = w.T.astype(mxu_dtype)                                        # (H+I, 4H)
    return w[:hidden], w[hidden:]                                    # w_h, w_x


def lstm_cell_forward(x, prev_state, fused_w):
    """One LSTM cell step. Mirrors the module forward: returns (out, inner_state)."""
    w_h, w_x = fused_w
    batch = x.shape[0]
    hidden = w_h.shape[0]

    if prev_state is None:
        prev_h = jnp.zeros((batch, hidden), dtype=x.dtype)
        inner_state = jnp.zeros((batch, hidden), dtype=x.dtype)
    else:
        prev_h, inner_state = prev_state

    full = lambda shape: pl.BlockSpec(shape, lambda: (0,) * len(shape))

    h_new, c_new = pl.pallas_call(
        lstm_cell_kernel,
        out_shape=(jax.ShapeDtypeStruct((batch, hidden), x.dtype),
                   jax.ShapeDtypeStruct((batch, hidden), x.dtype)),
        in_specs=[full(x.shape), full(prev_h.shape), full(inner_state.shape),
                  full(w_x.shape), full(w_h.shape)],
        out_specs=(full((batch, hidden)), full((batch, hidden))),
        # In-place state update when the caller donates the state buffers.
        input_output_aliases={1: 0, 2: 1},
    )(x, prev_h, inner_state, w_x, w_h)
    return h_new, c_new


def lstm_sequence_forward(x_seq, init_state, fused_w):
    """Runs the whole recurrence in ONE pallas_call.

    x_seq: (T, B, I). Weights stay VMEM-resident across the time grid; h/c are
    carried in VMEM scratch; only x[t] and h[t] stream per step.
    Returns (h_seq:(T,B,H), (h_T, c_T)).
    """
    w_h, w_x = fused_w
    seq_len, batch, input_size = x_seq.shape
    hidden = w_h.shape[0]

    if init_state is None:
        h0 = jnp.zeros((batch, hidden), dtype=x_seq.dtype)
        c0 = jnp.zeros((batch, hidden), dtype=x_seq.dtype)
    else:
        h0, c0 = init_state

    h_seq, c_final = pl.pallas_call(
        lstm_seq_kernel,
        out_shape=(jax.ShapeDtypeStruct((seq_len, batch, hidden), x_seq.dtype),
                   jax.ShapeDtypeStruct((batch, hidden), x_seq.dtype)),
        grid_spec=pltpu.PrefetchScalarGridSpec(
            num_scalar_prefetch=0,
            grid=(seq_len,),
            in_specs=[
                pl.BlockSpec((1, batch, input_size), lambda t: (t, 0, 0)),
                pl.BlockSpec((batch, hidden), lambda t: (0, 0)),
                pl.BlockSpec((batch, hidden), lambda t: (0, 0)),
                pl.BlockSpec(w_x.shape, lambda t: (0, 0)),   # VMEM-resident
                pl.BlockSpec(w_h.shape, lambda t: (0, 0)),   # VMEM-resident
            ],
            out_specs=(
                pl.BlockSpec((1, batch, hidden), lambda t: (t, 0, 0)),
                pl.BlockSpec((batch, hidden), lambda t: (0, 0)),
            ),
            scratch_shapes=[pltpu.VMEM((batch, hidden), jnp.float32),
                            pltpu.VMEM((batch, hidden), jnp.float32)],
        ),
        compiler_params=pltpu.CompilerParams(
            dimension_semantics=("arbitrary",)),   # recurrence: sequential
    )(x_seq, h0, c0, w_x, w_h)
    return h_seq, (h_seq[-1], c_final)


# --------------------------------------------------------------------------- #
# Pure-JAX reference (f32 path mirrors the original per-gate formulation)
# --------------------------------------------------------------------------- #
def _reference_forward(x, prev_state, params, mxu_dtype=jnp.float32):
    batch = x.shape[0]
    hidden = params["forget_gate_w"].shape[0]
    if prev_state is None:
        prev_h = jnp.zeros((batch, hidden), dtype=x.dtype)
        c = jnp.zeros((batch, hidden), dtype=x.dtype)
    else:
        prev_h, c = prev_state
    inputs = jnp.concatenate((prev_h, x), axis=1).astype(mxu_dtype)

    def lin(w):
        return jnp.dot(inputs, w.T.astype(mxu_dtype),
                       preferred_element_type=jnp.float32)

    f = jax.nn.sigmoid(lin(params["forget_gate_w"]))
    i = jax.nn.sigmoid(lin(params["input_gate_w"]))
    g = jnp.tanh(lin(params["candidate_w"]))
    o = jax.nn.sigmoid(lin(params["output_gate_w"]))
    c_new = c * f + i * g
    out = jnp.tanh(c_new) * o
    return out, c_new


if __name__ == "__main__":
    batch, input_size, hidden_size, seq_len = 2, 16, 32, 8

    key = jax.random.PRNGKey(0)
    k_wf, k_wi, k_wc, k_wo, k_x, k_h, k_c, k_xs = jax.random.split(key, 8)

    # Deterministic init matching reset_parameters: U(-sqrt(1/H), sqrt(1/H)).
    sqrt_k = (1.0 / hidden_size) ** 0.5
    w_shape = (hidden_size, hidden_size + input_size)
    params = {
        "forget_gate_w": jax.random.uniform(k_wf, w_shape, jnp.float32, -sqrt_k, sqrt_k),
        "input_gate_w": jax.random.uniform(k_wi, w_shape, jnp.float32, -sqrt_k, sqrt_k),
        "candidate_w": jax.random.uniform(k_wc, w_shape, jnp.float32, -sqrt_k, sqrt_k),
        "output_gate_w": jax.random.uniform(k_wo, w_shape, jnp.float32, -sqrt_k, sqrt_k),
    }
    # bias=False default; no bias parameters are created.

    x = jax.random.normal(k_x, (batch, input_size), jnp.float32)
    prev_h = jax.random.normal(k_h, (batch, hidden_size), jnp.float32)
    prev_c = jax.random.normal(k_c, (batch, hidden_size), jnp.float32)
    x_seq = jax.random.normal(k_xs, (seq_len, batch, input_size), jnp.float32)

    # ---- single-step cell, f32 MXU path (tight check) ---------------------- #
    fused_f32 = fuse_lstm_params(params, mxu_dtype=jnp.float32)
    out, inner_state = lstm_cell_forward(x, (prev_h, prev_c), fused_f32)
    out0, c0 = lstm_cell_forward(x, None, fused_f32)            # prev_state=None path
    jax.block_until_ready((out, inner_state, out0, c0))

    ref_out, ref_c = _reference_forward(x, (prev_h, prev_c), params)
    ref_out0, ref_c0 = _reference_forward(x, None, params)
    assert jnp.allclose(out, ref_out, atol=1e-4, rtol=1e-4)
    assert jnp.allclose(inner_state, ref_c, atol=1e-4, rtol=1e-4)
    assert jnp.allclose(out0, ref_out0, atol=1e-4, rtol=1e-4)
    assert jnp.allclose(c0, ref_c0, atol=1e-4, rtol=1e-4)

    # ---- single-step cell, bf16 MXU operands / f32 accumulation ------------ #
    fused_bf16 = fuse_lstm_params(params, mxu_dtype=jnp.bfloat16)
    out_bf, c_bf = lstm_cell_forward(x, (prev_h, prev_c), fused_bf16)
    jax.block_until_ready((out_bf, c_bf))
    ref_out_bf, ref_c_bf = _reference_forward(x, (prev_h, prev_c), params,
                                              mxu_dtype=jnp.bfloat16)
    assert jnp.allclose(out_bf, ref_out_bf, atol=1e-2, rtol=1e-2)
    assert jnp.allclose(c_bf, ref_c_bf, atol=1e-2, rtol=1e-2)

    # ---- full sequence inside one pallas_call (weights VMEM-resident) ------ #
    h_seq, (h_T, c_T) = lstm_sequence_forward(x_seq, (prev_h, prev_c), fused_f32)
    jax.block_until_ready((h_seq, h_T, c_T))

    h_r, c_r = prev_h, prev_c
    h_seq_ref = []
    for t in range(seq_len):
        h_r, c_r = _reference_forward(x_seq[t], (h_r, c_r), params)
        h_seq_ref.append(h_r)
    h_seq_ref = jnp.stack(h_seq_ref)
    assert jnp.allclose(h_seq, h_seq_ref, atol=1e-3, rtol=1e-3)
    assert jnp.allclose(h_T, h_seq_ref[-1], atol=1e-3, rtol=1e-3)
    assert jnp.allclose(c_T, c_r, atol=1e-3, rtol=1e-3)

    print("KERNEL_OK")
</pallas_src>

<mosaic_0001>
module attributes {stable_mosaic.version = 11 : i64} {
  func.func @lstm_cell_kernel(%arg0: memref<2x16xf32, #tpu.memory_space<vmem>>, %arg1: memref<2x32xf32, #tpu.memory_space<vmem>>, %arg2: memref<2x32xf32, #tpu.memory_space<vmem>>, %arg3: memref<16x128xf32, #tpu.memory_space<vmem>>, %arg4: memref<32x128xf32, #tpu.memory_space<vmem>>, %arg5: memref<2x32xf32, #tpu.memory_space<vmem>>, %arg6: memref<2x32xf32, #tpu.memory_space<vmem>>) attributes {dimension_semantics = [], scalar_prefetch = 0 : i64, scratch_operands = 0 : i64, tpu.core_type = #tpu.core_type<tc>} {
    %c0 = arith.constant 0 : index
    %c0_0 = arith.constant 0 : index
    %0 = vector.load %arg0[%c0, %c0_0] : memref<2x16xf32, #tpu.memory_space<vmem>>, vector<2x16xf32>
    %c0_1 = arith.constant 0 : index
    %c0_2 = arith.constant 0 : index
    %1 = vector.load %arg1[%c0_1, %c0_2] : memref<2x32xf32, #tpu.memory_space<vmem>>, vector<2x32xf32>
    %c0_3 = arith.constant 0 : index
    %c0_4 = arith.constant 0 : index
    %2 = vector.load %arg2[%c0_3, %c0_4] : memref<2x32xf32, #tpu.memory_space<vmem>>, vector<2x32xf32>
    %c0_5 = arith.constant 0 : index
    %c0_6 = arith.constant 0 : index
    %3 = vector.load %arg3[%c0_5, %c0_6] : memref<16x128xf32, #tpu.memory_space<vmem>>, vector<16x128xf32>
    %c0_7 = arith.constant 0 : index
    %c0_8 = arith.constant 0 : index
    %4 = vector.load %arg4[%c0_7, %c0_8] : memref<32x128xf32, #tpu.memory_space<vmem>>, vector<32x128xf32>
    %cst = arith.constant dense<0.000000e+00> : vector<2x128xf32>
    %5 = tpu.matmul %1, %4, %cst {dimension_numbers = #tpu.dot_dimension_numbers<[1], [0], [0], [1], [0, 0, 1, 1], [], []>} : vector<2x32xf32>, vector<32x128xf32>, vector<2x128xf32> -> vector<2x128xf32>
    %cst_9 = arith.constant dense<0.000000e+00> : vector<2x128xf32>
    %6 = tpu.matmul %0, %3, %cst_9 {dimension_numbers = #tpu.dot_dimension_numbers<[1], [0], [0], [1], [0, 0, 1, 1], [], []>} : vector<2x16xf32>, vector<16x128xf32>, vector<2x128xf32> -> vector<2x128xf32>
    %7 = arith.addf %5, %6 : vector<2x128xf32>
    %8 = vector.extract_strided_slice %7 {offsets = [0, 0], sizes = [2, 32], strides = [1, 1]} : vector<2x128xf32> to vector<2x32xf32>
    %cst_10 = arith.constant 5.000000e-01 : f32
    %9 = vector.broadcast %cst_10 : f32 to vector<2x32xf32>
    %10 = arith.mulf %9, %8 : vector<2x32xf32>
    %11 = math.tanh %10 : vector<2x32xf32>
    %cst_11 = arith.constant 5.000000e-01 : f32
    %12 = vector.broadcast %cst_11 : f32 to vector<2x32xf32>
    %13 = arith.mulf %12, %11 : vector<2x32xf32>
    %cst_12 = arith.constant 5.000000e-01 : f32
    %14 = vector.broadcast %cst_12 : f32 to vector<2x32xf32>
    %15 = arith.addf %13, %14 : vector<2x32xf32>
    %16 = vector.extract_strided_slice %7 {offsets = [0, 32], sizes = [2, 32], strides = [1, 1]} : vector<2x128xf32> to vector<2x32xf32>
    %cst_13 = arith.constant 5.000000e-01 : f32
    %17 = vector.broadcast %cst_13 : f32 to vector<2x32xf32>
    %18 = arith.mulf %17, %16 : vector<2x32xf32>
    %19 = math.tanh %18 : vector<2x32xf32>
    %cst_14 = arith.constant 5.000000e-01 : f32
    %20 = vector.broadcast %cst_14 : f32 to vector<2x32xf32>
    %21 = arith.mulf %20, %19 : vector<2x32xf32>
    %cst_15 = arith.constant 5.000000e-01 : f32
    %22 = vector.broadcast %cst_15 : f32 to vector<2x32xf32>
    %23 = arith.addf %21, %22 : vector<2x32xf32>
    %24 = vector.extract_strided_slice %7 {offsets = [0, 64], sizes = [2, 32], strides = [1, 1]} : vector<2x128xf32> to vector<2x32xf32>
    %25 = math.tanh %24 : vector<2x32xf32>
    %26 = vector.extract_strided_slice %7 {offsets = [0, 96], sizes = [2, 32], strides = [1, 1]} : vector<2x128xf32> to vector<2x32xf32>
    %cst_16 = arith.constant 5.000000e-01 : f32
    %27 = vector.broadcast %cst_16 : f32 to vector<2x32xf32>
    %28 = arith.mulf %27, %26 : vector<2x32xf32>
    %29 = math.tanh %28 : vector<2x32xf32>
    %cst_17 = arith.constant 5.000000e-01 : f32
    %30 = vector.broadcast %cst_17 : f32 to vector<2x32xf32>
    %31 = arith.mulf %30, %29 : vector<2x32xf32>
    %cst_18 = arith.constant 5.000000e-01 : f32
    %32 = vector.broadcast %cst_18 : f32 to vector<2x32xf32>
    %33 = arith.addf %31, %32 : vector<2x32xf32>
    %34 = arith.mulf %2, %15 : vector<2x32xf32>
    %35 = arith.mulf %23, %25 : vector<2x32xf32>
    %36 = arith.addf %34, %35 : vector<2x32xf32>
    %37 = math.tanh %36 : vector<2x32xf32>
    %38 = arith.mulf %37, %33 : vector<2x32xf32>
    %c0_19 = arith.constant 0 : index
    %c0_20 = arith.constant 0 : index
    %39 = vector.load %arg5[%c0_19, %c0_20] : memref<2x32xf32, #tpu.memory_space<vmem>>, vector<2x32xf32>
    tpu.vector_store %arg5[%c0_19, %c0_20], %38 {strides = array<i32>} : memref<2x32xf32, #tpu.memory_space<vmem>>, vector<2x32xf32>,
    %c0_21 = arith.constant 0 : index
    %c0_22 = arith.constant 0 : index
    %40 = vector.load %arg6[%c0_21, %c0_22] : memref<2x32xf32, #tpu.memory_space<vmem>>, vector<2x32xf32>
    tpu.vector_store %arg6[%c0_21, %c0_22], %36 {strides = array<i32>} : memref<2x32xf32, #tpu.memory_space<vmem>>, vector<2x32xf32>,
    return
  }
}

</mosaic_0001>

<llo_original>
// kernel: tpu_custom_call.1
$region0: #{tpu_custom_call.1}
  #allocation0 [shape = 'u32[]', space=smem, size = 0x4, offset = 0x4, fixed_abs, tag = 'smem constant byte address 0x4 - core index']
  #allocation1 [shape = 'u32[144,128]{1,0:T(1,128)}', space=vmem, size = 0x12000, scoped, tag = 'internal scratch']
  %s0 = inlined_call_operand.vmem [shape: f32[2,16], index: 0, kind: input, shape index: {}]
  %s1 = inlined_call_operand.hbm [shape: f32[2,32], index: 1, kind: input, shape index: {}, may-alias: {1,5}]
  %s2 = inlined_call_operand.hbm [shape: f32[2,32], index: 2, kind: input, shape index: {}, may-alias: {2,6}]
  %s3 = inlined_call_operand.hbm [shape: f32[16,128], index: 3, kind: input, shape index: {}]
  %s4 = inlined_call_operand.hbm [shape: f32[32,128], index: 4, kind: input, shape index: {}]
  %s5 = inlined_call_operand.hbm [shape: f32[2,32], index: 5, kind: output, shape index: {0}, may-alias: {1,5}]
  %s6 = inlined_call_operand.hbm [shape: f32[2,32], index: 6, kind: output, shape index: {1}, may-alias: {2,6}]
  %7 = xla_tuple %s5, %s6
  %s8 = sld [smem:[#allocation0]]
  $region54: #{tpu_custom_call.1} parent=0
    _
  %s10 = ssub.s32 1, %s8
  %s11 = scalar_select 0, %s10, %s8
  $region1: #{tpu_custom_call.1} parent=0
    #allocation2 [shape = 'u8[1024]{0}', space=vmem, size = 0x400, scoped, tag = 'input window, operand 1, single buffered']
    #allocation3 [shape = 's32[1]{0}', space=sflag, size = 0x4, scoped, tag = 'scoped memory for tpu_custom_call.1']
    #allocation4 [shape = 's32[1]{0}', space=sflag, size = 0x4, scoped, tag = 'scoped memory for tpu_custom_call.1']
    #allocation5 [shape = 'u8[1024]{0}', space=vmem, size = 0x400, scoped, tag = 'input window, operand 2, single buffered']
    #allocation6 [shape = 's32[1]{0}', space=sflag, size = 0x4, scoped, tag = 'scoped memory for tpu_custom_call.1']
    #allocation7 [shape = 'u8[8192]{0}', space=vmem, size = 0x2000, scoped, tag = 'input window, operand 3, single buffered']
    #allocation8 [shape = 'u8[16384]{0}', space=vmem, size = 0x4000, scoped, tag = 'input window, operand 4, single buffered']
    #allocation9 [shape = 's32[1]{0}', space=sflag, size = 0x4, scoped, tag = 'scoped memory for tpu_custom_call.1']
    #allocation10 [shape = 'u8[1024]{0}', space=vmem, size = 0x400, scoped, tag = 'output window, operand 0, single buffered']
    #allocation11 [shape = 'u8[1024]{0}', space=vmem, size = 0x400, scoped, tag = 'output window, operand 1, single buffered']
    #allocation12 [shape = 's32[1]{0}', space=sflag, size = 0x4, scoped, tag = 'scoped memory for tpu_custom_call.1']
    %12 = vsyncpa [#allocation3], 0
    %13 = vsyncpa [#allocation6], 0
    %14 = vsyncpa [#allocation9], 0
    %15 = vsyncpa [#allocation4], 0
    %16 = vsyncpa [#allocation12], 0
    // Predicated region
    $region2: #{tpu_custom_call.1} parent=1 // pred_check
      _
    $region3: #{tpu_custom_call.1} parent=1 // pred_check_branch
      %18 = sbr.rel (0) target = $region5
    $region4: #{tpu_custom_call.1} parent=1 // pred_region
      _
    $region5: #{tpu_custom_call.1} parent=1 // pred_fallthru
      _
    // Predicated region
    $region6: #{tpu_custom_call.1} parent=1 // pred_check
      _
    $region7: #{tpu_custom_call.1} parent=1 // pred_check_branch
      %20 = sbr.rel (0) target = $region9
    $region8: #{tpu_custom_call.1} parent=1 // pred_region
      %s22 = ssub.s32 32, 32
      %23 = vsyncadd [#allocation3], %s22
      %s25 = sshll.u32 [#allocation2], 4
      %s26 = int_to_ptr.vmem [resolvable:$true] %s25
      %28 = dma.hbm_to_vmem [thread:$0]  %s1, 32, %s26, [#allocation3]
    $region9: #{tpu_custom_call.1} parent=1 // pred_fallthru
      _
    // Predicated region
    $region10: #{tpu_custom_call.1} parent=1 // pred_check
      _
    $region11: #{tpu_custom_call.1} parent=1 // pred_check_branch
      %30 = sbr.rel (0) target = $region13
    $region12: #{tpu_custom_call.1} parent=1 // pred_region
      %s32 = ssub.s32 32, 32
      %33 = vsyncadd [#allocation6], %s32
      %s35 = sshll.u32 [#allocation5], 4
      %s36 = int_to_ptr.vmem [resolvable:$true] %s35
      %38 = dma.hbm_to_vmem [thread:$0]  %s2, 32, %s36, [#allocation6]
    $region13: #{tpu_custom_call.1} parent=1 // pred_fallthru
      _
    // Predicated region
    $region14: #{tpu_custom_call.1} parent=1 // pred_check
      _
    $region15: #{tpu_custom_call.1} parent=1 // pred_check_branch
      %40 = sbr.rel (0) target = $region17
    $region16: #{tpu_custom_call.1} parent=1 // pred_region
      %s42 = ssub.s32 256, 256
      %43 = vsyncadd [#allocation6], %s42
      %s44 = sshll.u32 [#allocation7], 4
      %s45 = int_to_ptr.vmem [resolvable:$true] %s44
      %50 = dma.hbm_to_vmem [thread:$0]  %s3, 256, %s45, [#allocation6], 128, 128, 8
    $region17: #{tpu_custom_call.1} parent=1 // pred_fallthru
      _
    // Predicated region
    $region18: #{tpu_custom_call.1} parent=1 // pred_check
      _
    $region19: #{tpu_custom_call.1} parent=1 // pred_check_branch
      %52 = sbr.rel (0) target = $region21
    $region20: #{tpu_custom_call.1} parent=1 // pred_region
      %s54 = ssub.s32 512, 512
      %55 = vsyncadd [#allocation9], %s54
      %s56 = sshll.u32 [#allocation8], 4
      %s57 = int_to_ptr.vmem [resolvable:$true] %s56
      %62 = dma.hbm_to_vmem [thread:$0]  %s4, 512, %s57, [#allocation9], 128, 128, 8
    $region21: #{tpu_custom_call.1} parent=1 // pred_fallthru
      _
    // Predicated region
    $region22: #{tpu_custom_call.1} parent=1 // pred_check
      _
    $region23: #{tpu_custom_call.1} parent=1 // pred_check_branch
      %64 = sbr.rel (0) target = $region25
    $region24: #{tpu_custom_call.1} parent=1 // pred_region
      %65 = dma.done [#allocation3], 32
    $region25: #{tpu_custom_call.1} parent=1 // pred_fallthru
      _
    // Predicated region
    $region26: #{tpu_custom_call.1} parent=1 // pred_check
      _
    $region27: #{tpu_custom_call.1} parent=1 // pred_check_branch
      %67 = sbr.rel (0) target = $region29
    $region28: #{tpu_custom_call.1} parent=1 // pred_region
      %68 = dma.done [#allocation6], 32
    $region29: #{tpu_custom_call.1} parent=1 // pred_fallthru
      _
    // Predicated region
    $region30: #{tpu_custom_call.1} parent=1 // pred_check
      _
    $region31: #{tpu_custom_call.1} parent=1 // pred_check_branch
      %70 = sbr.rel (0) target = $region33
    $region32: #{tpu_custom_call.1} parent=1 // pred_region
      %71 = dma.done [#allocation6], 256
    $region33: #{tpu_custom_call.1} parent=1 // pred_fallthru
      _
    // Predicated region
    $region34: #{tpu_custom_call.1} parent=1 // pred_check
      _
    $region35: #{tpu_custom_call.1} parent=1 // pred_check_branch
      %73 = sbr.rel (0) target = $region37
    $region36: #{tpu_custom_call.1} parent=1 // pred_region
      %74 = dma.done [#allocation9], 512
    $region37: #{tpu_custom_call.1} parent=1 // pred_fallthru
      _
    %v75 = vld [vmem:[%s0] sm:$0x3]
    %v76 = vld [vmem:[#allocation2] sm:$0x3]
    %v77 = vld [vmem:[#allocation5] sm:$0x3]
    %v78 = vld [vmem:[#allocation7] sm:$0xff]
    %v79 = vld [vmem:[#allocation7 + $0x8] sm:$0xff]
    %v80 = vld [vmem:[#allocation8] sm:$0xff]
    %v81 = vld [vmem:[#allocation8 + $0x8] sm:$0xff]
    %v82 = vld [vmem:[#allocation8 + $0x10] sm:$0xff]
    %v83 = vld [vmem:[#allocation8 + $0x18] sm:$0xff]
    %vm84 = vcmask 130048
    %v86 = vsel %vm84, %v75, 0
    %88 = vmatprep.subr.mxu0 0.0
    %89 = vmatpush1.msra.mxu0 %v78
    %90 = vmatprep.subr.mxu0 0.0
    %91 = vmatpush1.msra.mxu0 %v79
    %92 = vmatprep.subr.mxu0 0.0
    %93 = vmatpush1.msra.mxu0 0.0
    %94 = vmatprep.subr.mxu0 0.0
    %95 = vmatpush1.msra.mxu0 0.0
    %96 = vmatprep.subr.mxu0 0.0
    %97 = vmatpush1.msra.mxu0 0.0
    %98 = vmatprep.subr.mxu0 0.0
    %99 = vmatpush1.msra.mxu0 0.0
    %100 = vmatprep.subr.mxu0 0.0
    %101 = vmatpush1.msra.mxu0 0.0
    %102 = vmatprep.subr.mxu0 0.0
    %103 = vmatpush1.msra.mxu0 0.0
    %104 = vmatprep.subr.mxu0 0.0
    %105 = vmatpush1.msra.mxu0 0.0
    %106 = vmatprep.subr.mxu0 0.0
    %107 = vmatpush1.msra.mxu0 0.0
    %108 = vmatprep.subr.mxu0 0.0
    %109 = vmatpush1.msra.mxu0 0.0
    %110 = vmatprep.subr.mxu0 0.0
    %111 = vmatpush1.msra.mxu0 0.0
    %112 = vmatprep.subr.mxu0 0.0
    %113 = vmatpush1.msra.mxu0 0.0
    %114 = vmatprep.subr.mxu0 0.0
    %115 = vmatpush1.msra.mxu0 0.0
    %116 = vmatprep.subr.mxu0 0.0
    %117 = vmatpush1.msra.mxu0 0.0
    %118 = vmatprep.subr.mxu0 0.0
    %119 = vmatpush1.msra.mxu0 0.0
    %120 = vmatprep.subr.mxu0 0.0
    %121 = vmatpush1.msra.mxu0 0.0
    %122 = vmatprep.subr.mxu0 0.0
    %123 = vmatpush1.msra.mxu0 0.0
    %124 = vmatprep.subr.mxu0 0.0
    %125 = vmatpush1.msra.mxu0 0.0
    %126 = vmatprep.subr.mxu0 0.0
    %127 = vmatpush1.msra.mxu0 0.0
    %128 = vmatprep.subr.mxu0 0.0
    %129 = vmatpush1.msra.mxu0 0.0
    %130 = vmatprep.subr.mxu0 0.0
    %131 = vmatpush1.msra.mxu0 0.0
    %132 = vmatprep.subr.mxu0 0.0
    %133 = vmatpush1.msra.mxu0 0.0
    %134 = vmatprep.subr.mxu0 0.0
    %135 = vmatpush1.msra.mxu0 0.0
    %136 = vmatprep.subr.mxu0 0.0
    %137 = vmatpush1.msra.mxu0 0.0
    %138 = vmatprep.subr.mxu0 0.0
    %139 = vmatpush1.msra.mxu0 0.0
    %140 = vmatprep.subr.mxu0 0.0
    %141 = vmatpush1.msra.mxu0 0.0
    %142 = vmatprep.subr.mxu0 0.0
    %143 = vmatpush1.msra.mxu0 0.0
    %144 = vmatprep.subr.mxu0 0.0
    %145 = vmatpush1.msra.mxu0 0.0
    %146 = vmatprep.subr.mxu0 0.0
    %147 = vmatpush1.msra.mxu0 0.0
    %148 = vmatprep.subr.mxu0 0.0
    %149 = vmatpush1.msra.mxu0 0.0
    %150 = vmatprep.subr.mxu0 0.0
    %151 = vmatpush1.msra.mxu0 0.0
    %152 = vmatprep.mubr.f32.mxu0 0.0
    %153 = vmatmul.mubr.f32.gmra.mrb[0].mxu0 %v86
    %v154 = vpop.f32.mrb[0].mxu0
    %v155 = vadd.f32 0.0, %v154
    %v156 = vpop.f32.mrb[0].mxu0
    %157 = vdwg.mxu0
    %vm158 = vcmask 261120
    %v160 = vsel %vm158, %v76, 0
    %162 = vmatprep.subr.mxu0 0.0
    %163 = vmatpush1.msra.mxu0 %v80
    %164 = vmatprep.subr.mxu0 0.0
    %165 = vmatpush1.msra.mxu0 %v81
    %166 = vmatprep.subr.mxu0 0.0
    %167 = vmatpush1.msra.mxu0 %v82
    %168 = vmatprep.subr.mxu0 0.0
    %169 = vmatpush1.msra.mxu0 %v83
    %170 = vmatprep.subr.mxu0 0.0
    %171 = vmatpush1.msra.mxu0 0.0
    %172 = vmatprep.subr.mxu0 0.0
    %173 = vmatpush1.msra.mxu0 0.0
    %174 = vmatprep.subr.mxu0 0.0
    %175 = vmatpush1.msra.mxu0 0.0
    %176 = vmatprep.subr.mxu0 0.0
    %177 = vmatpush1.msra.mxu0 0.0
    %178 = vmatprep.subr.mxu0 0.0
    %179 = vmatpush1.msra.mxu0 0.0
    %180 = vmatprep.subr.mxu0 0.0
    %181 = vmatpush1.msra.mxu0 0.0
    %182 = vmatprep.subr.mxu0 0.0
    %183 = vmatpush1.msra.mxu0 0.0
    %184 = vmatprep.subr.mxu0 0.0
    %185 = vmatpush1.msra.mxu0 0.0
    %186 = vmatprep.subr.mxu0 0.0
    %187 = vmatpush1.msra.mxu0 0.0
    %188 = vmatprep.subr.mxu0 0.0
    %189 = vmatpush1.msra.mxu0 0.0
    %190 = vmatprep.subr.mxu0 0.0
    %191 = vmatpush1.msra.mxu0 0.0
    %192 = vmatprep.subr.mxu0 0.0
    %193 = vmatpush1.msra.mxu0 0.0
    %194 = vmatprep.subr.mxu0 0.0
    %195 = vmatpush1.msra.mxu0 0.0
    %196 = vmatprep.subr.mxu0 0.0
    %197 = vmatpush1.msra.mxu0 0.0
    %198 = vmatprep.subr.mxu0 0.0
    %199 = vmatpush1.msra.mxu0 0.0
    %200 = vmatprep.subr.mxu0 0.0
    %201 = vmatpush1.msra.mxu0 0.0
    %202 = vmatprep.subr.mxu0 0.0
    %203 = vmatpush1.msra.mxu0 0.0
    %204 = vmatprep.subr.mxu0 0.0
    %205 = vmatpush1.msra.mxu0 0.0
    %206 = vmatprep.subr.mxu0 0.0
    %207 = vmatpush1.msra.mxu0 0.0
    %208 = vmatprep.subr.mxu0 0.0
    %209 = vmatpush1.msra.mxu0 0.0
    %210 = vmatprep.subr.mxu0 0.0
    %211 = vmatpush1.msra.mxu0 0.0
    %212 = vmatprep.subr.mxu0 0.0
    %213 = vmatpush1.msra.mxu0 0.0
    %214 = vmatprep.subr.mxu0 0.0
    %215 = vmatpush1.msra.mxu0 0.0
    %216 = vmatprep.subr.mxu0 0.0
    %217 = vmatpush1.msra.mxu0 0.0
    %218 = vmatprep.subr.mxu0 0.0
    %219 = vmatpush1.msra.mxu0 0.0
    %220 = vmatprep.subr.mxu0 0.0
    %221 = vmatpush1.msra.mxu0 0.0
    %222 = vmatprep.subr.mxu0 0.0
    %223 = vmatpush1.msra.mxu0 0.0
    %224 = vmatprep.subr.mxu0 0.0
    %225 = vmatpush1.msra.mxu0 0.0
    %226 = vmatprep.mubr.f32.mxu0 0.0
    %227 = vmatmul.mubr.f32.gmra.mrb[0].mxu0 %v160
    %v228 = vpop.f32.mrb[0].mxu0
    %v229 = vadd.f32 %v155, %v228
    %v230 = vpop.f32.mrb[0].mxu0
    %231 = vdwg.mxu0
    %v232 = vmul.f32 %v229, 0.5
    %v233 = vtanh.pop %v232
    %v234 = vmul.f32 %v233, 0.5
    %v235 = vadd.f32 %v234, 0.5
    %v236 = vtanh.pop %v229
    %v237 = vmul.f32 %v77, %v235
    %239 = vrot.lane.b32.xlu0 %v236, 96
    %v240 = vpop.permute.xlu0 %239
    %v242 = vmul.f32 %v235, %v240
    %244 = vrot.lane.b32.xlu0 %v242, 96
    %v245 = vpop.permute.xlu0 %244
    %v247 = vadd.f32 %v237, %v245
    %v248 = vtanh.pop %v247
    %250 = vrot.lane.b32.xlu0 %v235, 32
    %v251 = vpop.permute.xlu0 %250
    %v253 = vmul.f32 %v248, %v251
    %vm254 = vcmask 254976
    %255 = vst.msk [vmem:[#allocation10] sm:$0x3] %vm254, %v253
    %256 = vst.msk [vmem:[#allocation11] sm:$0x3] %vm254, %v247
    // Predicated region
    $region38: #{tpu_custom_call.1} parent=1 // pred_check
      _
    $region39: #{tpu_custom_call.1} parent=1 // pred_check_branch
      %258 = sbr.rel (0) target = $region41
    $region40: #{tpu_custom_call.1} parent=1 // pred_region
      %s260 = ssub.s32 32, 32
      %261 = vsyncadd [#allocation4], %s260
      %s263 = sshll.u32 [#allocation10], 4
      %s264 = int_to_ptr.vmem [resolvable:$true] %s263
      %266 = dma.vmem_to_hbm [thread:$0]  %s264, 32, %s5, [#allocation4]
    $region41: #{tpu_custom_call.1} parent=1 // pred_fallthru
      _
    // Predicated region
    $region42: #{tpu_custom_call.1} parent=1 // pred_check
      _
    $region43: #{tpu_custom_call.1} parent=1 // pred_check_branch
      %268 = sbr.rel (0) target = $region45
    $region44: #{tpu_custom_call.1} parent=1 // pred_region
      %s270 = ssub.s32 32, 32
      %271 = vsyncadd [#allocation12], %s270
      %s273 = sshll.u32 [#allocation11], 4
      %s274 = int_to_ptr.vmem [resolvable:$true] %s273
      %276 = dma.vmem_to_hbm [thread:$0]  %s274, 32, %s6, [#allocation12]
    $region45: #{tpu_custom_call.1} parent=1 // pred_fallthru
      _
    // Predicated region
    $region46: #{tpu_custom_call.1} parent=1 // pred_check
      _
    $region47: #{tpu_custom_call.1} parent=1 // pred_check_branch
      %278 = sbr.rel (0) target = $region49
    $region48: #{tpu_custom_call.1} parent=1 // pred_region
      %279 = dma.done [#allocation4], 32
    $region49: #{tpu_custom_call.1} parent=1 // pred_fallthru
      _
    // Predicated region
    $region50: #{tpu_custom_call.1} parent=1 // pred_check
      _
    $region51: #{tpu_custom_call.1} parent=1 // pred_check_branch
      %281 = sbr.rel (0) target = $region53
    $region52: #{tpu_custom_call.1} parent=1 // pred_region
      %282 = dma.done [#allocation12], 32
    $region53: #{tpu_custom_call.1} parent=1 // pred_fallthru
      _
    %283 = vsyncpa [#allocation3], 1
    %284 = vsyncpa [#allocation6], 1
    %285 = vsyncpa [#allocation9], 1
    %286 = vsyncpa [#allocation4], 1
    %287 = vsyncpa [#allocation12], 1

</llo_original>
